<compile_context>
chip_gen: v6e
topology: v6e:2x2x1
jax: 0.10.0
libtpu: 0.0.40
codegen_flags: <defaults>
</compile_context>

<pallas_src>
import jax
import jax.numpy as jnp
from jax.experimental import pallas as pl
from jax.experimental.pallas import tpu as pltpu

IN_DIM = 32
HID_DIM = 256
OUT_DIM = 2
OUT_PAD = 128          # lane-dense padded output width
MAX_TB = 256           # batch tile cap (keeps h=[TB,256] f32 spill-bounded)


def _round_up(n, m):
    return ((n + m - 1) // m) * m


def mlp_kernel(x_ref, w1_ref, b1_ref, w2_ref, b2_ref, o_ref):
    # x tile: [TB, 32] f32 (already f32, no cast needed)
    h = jnp.dot(x_ref[...], w1_ref[...], preferred_element_type=jnp.float32)
    h = jnp.maximum(h + b1_ref[...], 0.0)                       # bias + ReLU
    y = jnp.dot(h, w2_ref[...], preferred_element_type=jnp.float32)
    o_ref[...] = (y + b2_ref[...]).astype(o_ref.dtype)          # [TB, 128]


def simple_classifier(x, w1, b1, w2, b2):
    """x: [B, 32] f32 -> [B, 2] f32.

    w1: [32, 256], b1: [256], w2: [256, 2], b2: [2]
    """
    B = x.shape[0]

    # Batch tile: multiple of 8 (sublane), capped at MAX_TB rows.
    TB = min(MAX_TB, _round_up(B, 8))
    B_pad = _round_up(B, TB)
    if B_pad != B:
        x = jnp.pad(x, ((0, B_pad - B), (0, 0)))

    # Lane-dense output: zero-pad W2/b2 from 2 -> 128 output columns.
    w2p = jnp.pad(w2, ((0, 0), (0, OUT_PAD - OUT_DIM)))
    b2p = jnp.pad(b2, (0, OUT_PAD - OUT_DIM)).reshape(1, OUT_PAD)
    b1_2d = b1.reshape(1, HID_DIM)

    grid = (B_pad // TB,)

    flops = 2 * B_pad * IN_DIM * HID_DIM + 2 * B_pad * HID_DIM * OUT_PAD
    bytes_accessed = 4 * (B_pad * IN_DIM + IN_DIM * HID_DIM + HID_DIM
                          + HID_DIM * OUT_PAD + OUT_PAD + B_pad * OUT_PAD)

    out = pl.pallas_call(
        mlp_kernel,
        out_shape=jax.ShapeDtypeStruct((B_pad, OUT_PAD), jnp.float32),
        grid=grid,
        in_specs=[
            pl.BlockSpec((TB, IN_DIM), lambda i: (i, 0)),        # x tile
            pl.BlockSpec((IN_DIM, HID_DIM), lambda i: (0, 0)),   # W1 (resident)
            pl.BlockSpec((1, HID_DIM), lambda i: (0, 0)),        # b1 (resident)
            pl.BlockSpec((HID_DIM, OUT_PAD), lambda i: (0, 0)),  # W2 (resident)
            pl.BlockSpec((1, OUT_PAD), lambda i: (0, 0)),        # b2 (resident)
        ],
        out_specs=pl.BlockSpec((TB, OUT_PAD), lambda i: (i, 0)),
        compiler_params=pltpu.CompilerParams(
            dimension_semantics=("parallel",)),
        cost_estimate=pl.CostEstimate(
            flops=flops, transcendentals=0, bytes_accessed=bytes_accessed),
    )(x, w1, b1_2d, w2p, b2p)

    return out[:B, :OUT_DIM]


def make_params(key):
    """Deterministic parameter init mirroring nn.Linear shapes.

    PyTorch nn.Linear(32, 256) has weight [256, 32]; we build that and
    transpose to [32, 256] for the x @ W convention used in the kernel.
    """
    k1, k2, k3, k4 = jax.random.split(key, 4)
    bound1 = 1.0 / jnp.sqrt(jnp.float32(IN_DIM))
    bound2 = 1.0 / jnp.sqrt(jnp.float32(HID_DIM))
    w1_torch = jax.random.uniform(k1, (HID_DIM, IN_DIM), jnp.float32,
                                  -bound1, bound1)
    b1 = jax.random.uniform(k2, (HID_DIM,), jnp.float32, -bound1, bound1)
    w2_torch = jax.random.uniform(k3, (OUT_DIM, HID_DIM), jnp.float32,
                                  -bound2, bound2)
    b2 = jax.random.uniform(k4, (OUT_DIM,), jnp.float32, -bound2, bound2)
    return w1_torch.T, b1, w2_torch.T, b2


def reference(x, w1, b1, w2, b2):
    h = jnp.maximum(x @ w1 + b1, 0.0)
    return h @ w2 + b2


if __name__ == "__main__":
    key = jax.random.PRNGKey(0)
    kx, kp = jax.random.split(key)

    B = 8
    x = jax.random.normal(kx, (B, IN_DIM), jnp.float32)
    w1, b1, w2, b2 = make_params(kp)

    out = simple_classifier(x, w1, b1, w2, b2)
    out = jax.block_until_ready(out)

    ref = reference(x, w1, b1, w2, b2)
    assert out.shape == (B, OUT_DIM), out.shape
    assert jnp.allclose(out, ref, atol=1e-5, rtol=1e-5), (
        float(jnp.max(jnp.abs(out - ref))))

    # also sanity-check a non-tile-multiple / larger batch path
    B2 = 300
    x2 = jax.random.normal(jax.random.PRNGKey(1), (B2, IN_DIM), jnp.float32)
    out2 = jax.block_until_ready(simple_classifier(x2, w1, b1, w2, b2))
    ref2 = reference(x2, w1, b1, w2, b2)
    assert out2.shape == (B2, OUT_DIM), out2.shape
    assert jnp.allclose(out2, ref2, atol=1e-5, rtol=1e-5), (
        float(jnp.max(jnp.abs(out2 - ref2))))

    print("KERNEL_OK")
</pallas_src>

<mosaic_0001>
module attributes {stable_mosaic.version = 11 : i64} {
  func.func @mlp_kernel(%arg0: i32, %arg1: memref<8x32xf32, #tpu.memory_space<vmem>>, %arg2: memref<32x256xf32, #tpu.memory_space<vmem>>, %arg3: memref<1x256xf32, #tpu.memory_space<vmem>>, %arg4: memref<256x128xf32, #tpu.memory_space<vmem>>, %arg5: memref<1x128xf32, #tpu.memory_space<vmem>>, %arg6: memref<8x128xf32, #tpu.memory_space<vmem>>) attributes {dimension_semantics = [#tpu.dimension_semantics<parallel>], iteration_bounds = array<i64: 1>, scalar_prefetch = 0 : i64, scratch_operands = 0 : i64, tpu.core_type = #tpu.core_type<tc>, window_params = [{transform_indices = @transform_0, window_bounds = array<i64: 8, 32>}, {pipeline_mode = #tpu.pipeline_mode<synchronous>, transform_indices = @transform_1, window_bounds = array<i64: 32, 256>}, {pipeline_mode = #tpu.pipeline_mode<synchronous>, transform_indices = @transform_2, window_bounds = array<i64: 1, 256>}, {pipeline_mode = #tpu.pipeline_mode<synchronous>, transform_indices = @transform_3, window_bounds = array<i64: 256, 128>}, {pipeline_mode = #tpu.pipeline_mode<synchronous>, transform_indices = @transform_4, window_bounds = array<i64: 1, 128>}, {transform_indices = @transform_5, window_bounds = array<i64: 8, 128>}]} {
    %c0 = arith.constant 0 : index
    %c0_0 = arith.constant 0 : index
    %0 = vector.load %arg1[%c0, %c0_0] : memref<8x32xf32, #tpu.memory_space<vmem>>, vector<8x32xf32>
    %c0_1 = arith.constant 0 : index
    %c0_2 = arith.constant 0 : index
    %1 = vector.load %arg2[%c0_1, %c0_2] : memref<32x256xf32, #tpu.memory_space<vmem>>, vector<32x256xf32>
    %cst = arith.constant dense<0.000000e+00> : vector<8x256xf32>
    %2 = tpu.matmul %0, %1, %cst {dimension_numbers = #tpu.dot_dimension_numbers<[1], [0], [0], [1], [0, 0, 1, 1], [], []>} : vector<8x32xf32>, vector<32x256xf32>, vector<8x256xf32> -> vector<8x256xf32>
    %c0_3 = arith.constant 0 : index
    %c0_4 = arith.constant 0 : index
    %3 = vector.load %arg3[%c0_3, %c0_4] : memref<1x256xf32, #tpu.memory_space<vmem>>, vector<1x256xf32>
    %4 = vector.broadcast %3 : vector<1x256xf32> to vector<8x256xf32>
    %5 = arith.addf %2, %4 : vector<8x256xf32>
    %cst_5 = arith.constant 0.000000e+00 : f32
    %6 = vector.broadcast %cst_5 : f32 to vector<8x256xf32>
    %7 = arith.maximumf %5, %6 : vector<8x256xf32>
    %c0_6 = arith.constant 0 : index
    %c0_7 = arith.constant 0 : index
    %8 = vector.load %arg4[%c0_6, %c0_7] : memref<256x128xf32, #tpu.memory_space<vmem>>, vector<256x128xf32>
    %cst_8 = arith.constant dense<0.000000e+00> : vector<8x128xf32>
    %9 = tpu.matmul %7, %8, %cst_8 {dimension_numbers = #tpu.dot_dimension_numbers<[1], [0], [0], [1], [0, 0, 1, 1], [], []>} : vector<8x256xf32>, vector<256x128xf32>, vector<8x128xf32> -> vector<8x128xf32>
    %c0_9 = arith.constant 0 : index
    %c0_10 = arith.constant 0 : index
    %10 = vector.load %arg5[%c0_9, %c0_10] : memref<1x128xf32, #tpu.memory_space<vmem>>, vector<1x128xf32>
    %11 = vector.broadcast %10 : vector<1x128xf32> to vector<8x128xf32>
    %12 = arith.addf %9, %11 : vector<8x128xf32>
    %c0_11 = arith.constant 0 : index
    %c0_12 = arith.constant 0 : index
    %13 = vector.load %arg6[%c0_11, %c0_12] : memref<8x128xf32, #tpu.memory_space<vmem>>, vector<8x128xf32>
    tpu.vector_store %arg6[%c0_11, %c0_12], %12 {strides = array<i32>} : memref<8x128xf32, #tpu.memory_space<vmem>>, vector<8x128xf32>,
    return
  }
  func.func @transform_0(%arg0: i32) -> (i32, i32) {
    %c0_i32 = arith.constant 0 : i32
    %c0_i32_0 = arith.constant 0 : i32
    return %arg0, %c0_i32 : i32, i32
  }
  func.func @transform_1(%arg0: i32) -> (i32, i32) {
    %c0_i32 = arith.constant 0 : i32
    %c0_i32_0 = arith.constant 0 : i32
    %c0_i32_1 = arith.constant 0 : i32
    return %c0_i32, %c0_i32_0 : i32, i32
  }
  func.func @transform_2(%arg0: i32) -> (i32, i32) {
    %c0_i32 = arith.constant 0 : i32
    %c0_i32_0 = arith.constant 0 : i32
    %c0_i32_1 = arith.constant 0 : i32
    return %c0_i32, %c0_i32_0 : i32, i32
  }
  func.func @transform_3(%arg0: i32) -> (i32, i32) {
    %c0_i32 = arith.constant 0 : i32
    %c0_i32_0 = arith.constant 0 : i32
    %c0_i32_1 = arith.constant 0 : i32
    return %c0_i32, %c0_i32_0 : i32, i32
  }
  func.func @transform_4(%arg0: i32) -> (i32, i32) {
    %c0_i32 = arith.constant 0 : i32
    %c0_i32_0 = arith.constant 0 : i32
    %c0_i32_1 = arith.constant 0 : i32
    return %c0_i32, %c0_i32_0 : i32, i32
  }
  func.func @transform_5(%arg0: i32) -> (i32, i32) {
    %c0_i32 = arith.constant 0 : i32
    %c0_i32_0 = arith.constant 0 : i32
    return %arg0, %c0_i32 : i32, i32
  }
}

</mosaic_0001>

<llo_original>
// kernel: tpu_custom_call.1
$region0: #{tpu_custom_call.1}
  #allocation0 [shape = 'u32[]', space=smem, size = 0x4, offset = 0x4, fixed_abs, tag = 'smem constant byte address 0x4 - core index']
  #allocation1 [shape = 'u32[144,128]{1,0:T(1,128)}', space=vmem, size = 0x12000, scoped, tag = 'internal scratch']
  %s0 = inlined_call_operand.hbm [shape: f32[8,32], index: 0, kind: input, shape index: {}]
  %s1 = inlined_call_operand.hbm [shape: f32[32,256], index: 1, kind: input, shape index: {}]
  %s2 = inlined_call_operand.vmem [shape: f32[1,256], index: 2, kind: input, shape index: {}]
  %s3 = inlined_call_operand.hbm [shape: f32[256,128], index: 3, kind: input, shape index: {}]
  %s4 = inlined_call_operand.vmem [shape: f32[1,128], index: 4, kind: input, shape index: {}]
  %s5 = inlined_call_operand.hbm [shape: f32[8,128], index: 5, kind: output, shape index: {}]
  %s6 = sld [smem:[#allocation0]]
  $region42: #{tpu_custom_call.1} parent=0
    _
  %s8 = ssub.s32 1, %s6
  %s9 = scalar_select 0, %s8, %s6
  $region1: #{tpu_custom_call.1} parent=0
    #allocation2 [shape = 'u8[4096]{0}', space=vmem, size = 0x1000, scoped, tag = 'input window, operand 0, single buffered']
    #allocation3 [shape = 's32[1]{0}', space=sflag, size = 0x4, scoped, tag = 'scoped memory for tpu_custom_call.1']
    #allocation4 [shape = 's32[1]{0}', space=sflag, size = 0x4, scoped, tag = 'scoped memory for tpu_custom_call.1']
    #allocation5 [shape = 'u8[32768]{0}', space=vmem, size = 0x8000, scoped, tag = 'input window, operand 1, single buffered']
    #allocation6 [shape = 's32[1]{0}', space=sflag, size = 0x4, scoped, tag = 'scoped memory for tpu_custom_call.1']
    #allocation7 [shape = 'u8[131072]{0}', space=vmem, size = 0x20000, scoped, tag = 'input window, operand 3, single buffered']
    #allocation8 [shape = 'u8[4096]{0}', space=vmem, size = 0x1000, scoped, tag = 'output window, operand 0, single buffered']
    %10 = vsyncpa [#allocation3], 0
    %11 = vsyncpa [#allocation6], 0
    %12 = vsyncpa [#allocation4], 0
    // Predicated region
    $region2: #{tpu_custom_call.1} parent=1 // pred_check
      _
    $region3: #{tpu_custom_call.1} parent=1 // pred_check_branch
      %14 = sbr.rel (0) target = $region5
    $region4: #{tpu_custom_call.1} parent=1 // pred_region
      %s16 = ssub.s32 128, 128
      %17 = vsyncadd [#allocation3], %s16
      %s19 = sshll.u32 [#allocation2], 4
      %s20 = int_to_ptr.vmem [resolvable:$true] %s19
      %22 = dma.hbm_to_vmem [thread:$0]  %s0, 128, %s20, [#allocation3]
    $region5: #{tpu_custom_call.1} parent=1 // pred_fallthru
      _
    // Predicated region
    $region6: #{tpu_custom_call.1} parent=1 // pred_check
      _
    $region7: #{tpu_custom_call.1} parent=1 // pred_check_branch
      %24 = sbr.rel (0) target = $region9
    $region8: #{tpu_custom_call.1} parent=1 // pred_region
      %s26 = ssub.s32 1024, 1024
      %27 = vsyncadd [#allocation6], %s26
      %s28 = sshll.u32 [#allocation5], 4
      %s29 = int_to_ptr.vmem [resolvable:$true] %s28
      %34 = dma.hbm_to_vmem [thread:$0]  %s1, 1024, %s29, [#allocation6], 256, 256, 16
    $region9: #{tpu_custom_call.1} parent=1 // pred_fallthru
      _
    // Predicated region
    $region10: #{tpu_custom_call.1} parent=1 // pred_check
      _
    $region11: #{tpu_custom_call.1} parent=1 // pred_check_branch
      %36 = sbr.rel (0) target = $region13
    $region12: #{tpu_custom_call.1} parent=1 // pred_region
      _
    $region13: #{tpu_custom_call.1} parent=1 // pred_fallthru
      _
    // Predicated region
    $region14: #{tpu_custom_call.1} parent=1 // pred_check
      _
    $region15: #{tpu_custom_call.1} parent=1 // pred_check_branch
      %38 = sbr.rel (0) target = $region17
    $region16: #{tpu_custom_call.1} parent=1 // pred_region
      %s40 = ssub.s32 4096, 4096
      %41 = vsyncadd [#allocation6], %s40
      %s42 = sshll.u32 [#allocation7], 4
      %s43 = int_to_ptr.vmem [resolvable:$true] %s42
      %48 = dma.hbm_to_vmem [thread:$0]  %s3, 4096, %s43, [#allocation6], 128, 128, 8
    $region17: #{tpu_custom_call.1} parent=1 // pred_fallthru
      _
    // Predicated region
    $region18: #{tpu_custom_call.1} parent=1 // pred_check
      _
    $region19: #{tpu_custom_call.1} parent=1 // pred_check_branch
      %50 = sbr.rel (0) target = $region21
    $region20: #{tpu_custom_call.1} parent=1 // pred_region
      _
    $region21: #{tpu_custom_call.1} parent=1 // pred_fallthru
      _
    // Predicated region
    $region22: #{tpu_custom_call.1} parent=1 // pred_check
      _
    $region23: #{tpu_custom_call.1} parent=1 // pred_check_branch
      %52 = sbr.rel (0) target = $region25
    $region24: #{tpu_custom_call.1} parent=1 // pred_region
      %53 = dma.done [#allocation3], 128
    $region25: #{tpu_custom_call.1} parent=1 // pred_fallthru
      _
    // Predicated region
    $region26: #{tpu_custom_call.1} parent=1 // pred_check
      _
    $region27: #{tpu_custom_call.1} parent=1 // pred_check_branch
      %55 = sbr.rel (0) target = $region29
    $region28: #{tpu_custom_call.1} parent=1 // pred_region
      %56 = dma.done [#allocation6], 1024
    $region29: #{tpu_custom_call.1} parent=1 // pred_fallthru
      _
    // Predicated region
    $region30: #{tpu_custom_call.1} parent=1 // pred_check
      _
    $region31: #{tpu_custom_call.1} parent=1 // pred_check_branch
      %58 = sbr.rel (0) target = $region33
    $region32: #{tpu_custom_call.1} parent=1 // pred_region
      %59 = dma.done [#allocation6], 4096
    $region33: #{tpu_custom_call.1} parent=1 // pred_fallthru
      _
    %v60 = vld [vmem:[#allocation2] sm:$0xff]
    %v61 = vld [vmem:[#allocation5] sm:$0xff]
    %v62 = vld [vmem:[#allocation5 + $0x8] sm:$0xff]
    %v63 = vld [vmem:[#allocation5 + $0x10] sm:$0xff]
    %v64 = vld [vmem:[#allocation5 + $0x18] sm:$0xff]
    %v65 = vld [vmem:[#allocation5 + $0x20] sm:$0xff]
    %v66 = vld [vmem:[#allocation5 + $0x28] sm:$0xff]
    %v67 = vld [vmem:[#allocation5 + $0x30] sm:$0xff]
    %v68 = vld [vmem:[#allocation5 + $0x38] sm:$0xff]
    %v69 = vld [vmem:[%s2] sm:$0x3]
    %v71 = vlaneseq
    %v72 = vshrl.u32 %v71, 7
    %v73 = vsub.s32 0, %v72
    %v74 = vrot.slane %v69, %v73
    %v75 = vlaneseq
    %v76 = vshrl.u32 %v75, 7
    %v77 = vsub.s32 1, %v76
    %v78 = vrot.slane %v69, %v77
    %vm81 = vcmask 261120
    %v83 = vsel %vm81, %v60, 0
    %85 = vmatprep.subr.mxu0 0.0
    %86 = vmatpush1.msra.mxu0 0.0
    %87 = vmatprep.subr.mxu0 0.0
    %88 = vmatpush1.msra.mxu0 0.0
    %89 = vmatprep.subr.mxu0 0.0
    %90 = vmatpush1.msra.mxu0 0.0
    %91 = vmatprep.subr.mxu0 0.0
    %92 = vmatpush1.msra.mxu0 0.0
    %93 = vmatprep.subr.mxu0 0.0
    %94 = vmatpush1.msra.mxu0 0.0
    %95 = vmatprep.subr.mxu0 0.0
    %96 = vmatpush1.msra.mxu0 0.0
    %97 = vmatprep.subr.mxu0 0.0
    %98 = vmatpush1.msra.mxu0 0.0
    %99 = vmatprep.subr.mxu0 0.0
    %100 = vmatpush1.msra.mxu0 0.0
    %101 = vmatprep.subr.mxu0 0.0
    %102 = vmatpush1.msra.mxu0 0.0
    %103 = vmatprep.subr.mxu0 0.0
    %104 = vmatpush1.msra.mxu0 0.0
    %105 = vmatprep.subr.mxu0 0.0
    %106 = vmatpush1.msra.mxu0 0.0
    %107 = vmatprep.subr.mxu0 0.0
    %108 = vmatpush1.msra.mxu0 0.0
    %109 = vmatprep.subr.mxu0 %v68
    %110 = vmatpush1.msra.mxu0 %v67
    %111 = vmatprep.subr.mxu0 %v66
    %112 = vmatpush1.msra.mxu0 %v65
    %113 = vmatprep.subr.mxu0 %v64
    %114 = vmatpush1.msra.mxu0 %v63
    %115 = vmatprep.subr.mxu0 %v62
    %116 = vmatpush1.msra.mxu0 %v61
    %117 = vmatprep.subr.mxu0 0.0
    %118 = vmatpush2.msra.mxu0 0.0
    %119 = vmatprep.subr.mxu0 0.0
    %120 = vmatpush2.msra.mxu0 0.0
    %121 = vmatprep.subr.mxu0 0.0
    %122 = vmatpush2.msra.mxu0 0.0
    %123 = vmatprep.subr.mxu0 0.0
    %124 = vmatpush2.msra.mxu0 0.0
    %125 = vmatprep.subr.mxu0 0.0
    %126 = vmatpush2.msra.mxu0 0.0
    %127 = vmatprep.subr.mxu0 0.0
    %128 = vmatpush2.msra.mxu0 0.0
    %129 = vmatprep.subr.mxu0 0.0
    %130 = vmatpush2.msra.mxu0 0.0
    %131 = vmatprep.subr.mxu0 0.0
    %132 = vmatpush2.msra.mxu0 0.0
    %133 = vmatprep.subr.mxu0 0.0
    %134 = vmatpush2.msra.mxu0 0.0
    %135 = vmatprep.subr.mxu0 0.0
    %136 = vmatpush2.msra.mxu0 0.0
    %137 = vmatprep.subr.mxu0 0.0
    %138 = vmatpush2.msra.mxu0 0.0
    %139 = vmatprep.subr.mxu0 0.0
    %140 = vmatpush2.msra.mxu0 0.0
    %141 = vmatprep.subr.mxu0 0.0
    %142 = vmatpush2.msra.mxu0 0.0
    %143 = vmatprep.subr.mxu0 0.0
    %144 = vmatpush2.msra.mxu0 0.0
    %145 = vmatprep.subr.mxu0 0.0
    %146 = vmatpush2.msra.mxu0 0.0
    %147 = vmatprep.subr.mxu0 0.0
    %148 = vmatpush2.msra.mxu0 0.0
    %149 = vmatprep.mubr.f32.mxu0 0.0
    %150 = vmatmul.mubr.f32.gmra.mxu0 %v83
    %v151 = vpop.f32.mrf.mxu0
    %v152 = vadd.f32 %v74, %v151
    %v153 = vpop.f32.mrf.mxu0
    %v154 = vadd.f32 %v78, %v153
    %155 = vdwg.mxu0
    %v156 = vmax.f32 %v152, 0.0
    %v157 = vmax.f32 %v154, 0.0
    %v158 = vld [vmem:[#allocation7] sm:$0xff]
    %v159 = vld [vmem:[#allocation7 + $0x8] sm:$0xff]
    %v160 = vld [vmem:[#allocation7 + $0x10] sm:$0xff]
    %v161 = vld [vmem:[#allocation7 + $0x18] sm:$0xff]
    %v162 = vld [vmem:[#allocation7 + $0x20] sm:$0xff]
    %v163 = vld [vmem:[#allocation7 + $0x28] sm:$0xff]
    %v164 = vld [vmem:[#allocation7 + $0x30] sm:$0xff]
    %v165 = vld [vmem:[#allocation7 + $0x38] sm:$0xff]
    %v166 = vld [vmem:[#allocation7 + $0x40] sm:$0xff]
    %v167 = vld [vmem:[#allocation7 + $0x48] sm:$0xff]
    %v168 = vld [vmem:[#allocation7 + $0x50] sm:$0xff]
    %v169 = vld [vmem:[#allocation7 + $0x58] sm:$0xff]
    %v170 = vld [vmem:[#allocation7 + $0x60] sm:$0xff]
    %v171 = vld [vmem:[#allocation7 + $0x68] sm:$0xff]
    %v172 = vld [vmem:[#allocation7 + $0x70] sm:$0xff]
    %v173 = vld [vmem:[#allocation7 + $0x78] sm:$0xff]
    %v174 = vld [vmem:[#allocation7 + $0x80] sm:$0xff]
    %v175 = vld [vmem:[#allocation7 + $0x88] sm:$0xff]
    %v176 = vld [vmem:[#allocation7 + $0x90] sm:$0xff]
    %v177 = vld [vmem:[#allocation7 + $0x98] sm:$0xff]
    %v178 = vld [vmem:[#allocation7 + $0xa0] sm:$0xff]
    %v179 = vld [vmem:[#allocation7 + $0xa8] sm:$0xff]
    %v180 = vld [vmem:[#allocation7 + $0xb0] sm:$0xff]
    %v181 = vld [vmem:[#allocation7 + $0xb8] sm:$0xff]
    %v182 = vld [vmem:[#allocation7 + $0xc0] sm:$0xff]
    %v183 = vld [vmem:[#allocation7 + $0xc8] sm:$0xff]
    %v184 = vld [vmem:[#allocation7 + $0xd0] sm:$0xff]
    %v185 = vld [vmem:[#allocation7 + $0xd8] sm:$0xff]
    %v186 = vld [vmem:[#allocation7 + $0xe0] sm:$0xff]
    %v187 = vld [vmem:[#allocation7 + $0xe8] sm:$0xff]
    %v188 = vld [vmem:[#allocation7 + $0xf0] sm:$0xff]
    %v189 = vld [vmem:[#allocation7 + $0xf8] sm:$0xff]
    %v190 = vld [vmem:[%s4] sm:$0x1]
    %v192 = vlaneseq
    %v193 = vshrl.u32 %v192, 7
    %v194 = vsub.s32 0, %v193
    %v195 = vrot.slane %v190, %v194
    %197 = vmatprep.subr.mxu0 0.0
    %198 = vmatpush1.msra.mxu0 %v173
    %199 = vmatprep.subr.mxu0 0.0
    %200 = vmatpush1.msra.mxu0 %v172
    %201 = vmatprep.subr.mxu0 0.0
    %202 = vmatpush1.msra.mxu0 %v171
    %203 = vmatprep.subr.mxu0 0.0
    %204 = vmatpush1.msra.mxu0 %v170
    %205 = vmatprep.subr.mxu0 0.0
    %206 = vmatpush1.msra.mxu0 %v169
    %207 = vmatprep.subr.mxu0 0.0
    %208 = vmatpush1.msra.mxu0 %v168
    %209 = vmatprep.subr.mxu0 0.0
    %210 = vmatpush1.msra.mxu0 %v167
    %211 = vmatprep.subr.mxu0 0.0
    %212 = vmatpush1.msra.mxu0 %v166
    %213 = vmatprep.subr.mxu0 0.0
    %214 = vmatpush1.msra.mxu0 %v165
    %215 = vmatprep.subr.mxu0 0.0
    %216 = vmatpush1.msra.mxu0 %v164
    %217 = vmatprep.subr.mxu0 0.0
    %218 = vmatpush1.msra.mxu0 %v163
    %219 = vmatprep.subr.mxu0 0.0
    %220 = vmatpush1.msra.mxu0 %v162
    %221 = vmatprep.subr.mxu0 0.0
    %222 = vmatpush1.msra.mxu0 %v161
    %223 = vmatprep.subr.mxu0 0.0
    %224 = vmatpush1.msra.mxu0 %v160
    %225 = vmatprep.subr.mxu0 0.0
    %226 = vmatpush1.msra.mxu0 %v159
    %227 = vmatprep.subr.mxu0 0.0
    %228 = vmatpush1.msra.mxu0 %v158
    %229 = vmatprep.subr.mxu0 0.0
    %230 = vmatpush2.msra.mxu0 %v189
    %231 = vmatprep.subr.mxu0 0.0
    %232 = vmatpush2.msra.mxu0 %v188
    %233 = vmatprep.subr.mxu0 0.0
    %234 = vmatpush2.msra.mxu0 %v187
    %235 = vmatprep.subr.mxu0 0.0
    %236 = vmatpush2.msra.mxu0 %v186
    %237 = vmatprep.subr.mxu0 0.0
    %238 = vmatpush2.msra.mxu0 %v185
    %239 = vmatprep.subr.mxu0 0.0
    %240 = vmatpush2.msra.mxu0 %v184
    %241 = vmatprep.subr.mxu0 0.0
    %242 = vmatpush2.msra.mxu0 %v183
    %243 = vmatprep.subr.mxu0 0.0
    %244 = vmatpush2.msra.mxu0 %v182
    %245 = vmatprep.subr.mxu0 0.0
    %246 = vmatpush2.msra.mxu0 %v181
    %247 = vmatprep.subr.mxu0 0.0
    %248 = vmatpush2.msra.mxu0 %v180
    %249 = vmatprep.subr.mxu0 0.0
    %250 = vmatpush2.msra.mxu0 %v179
    %251 = vmatprep.subr.mxu0 0.0
    %252 = vmatpush2.msra.mxu0 %v178
    %253 = vmatprep.subr.mxu0 0.0
    %254 = vmatpush2.msra.mxu0 %v177
    %255 = vmatprep.subr.mxu0 0.0
    %256 = vmatpush2.msra.mxu0 %v176
    %257 = vmatprep.subr.mxu0 0.0
    %258 = vmatpush2.msra.mxu0 %v175
    %259 = vmatprep.subr.mxu0 0.0
    %260 = vmatpush2.msra.mxu0 %v174
    %261 = vmatprep.mubr.f32.mxu0 %v157
    %262 = vmatmul.mubr.f32.gmra.mxu0 %v156
    %v263 = vpop.f32.mrf.mxu0
    %v264 = vadd.f32 %v195, %v263
    %v265 = vpop.f32.mrf.mxu0
    %266 = vdwg.mxu0
    %267 = vst [vmem:[#allocation8] sm:$0xff] %v264
    // Predicated region
    $region34: #{tpu_custom_call.1} parent=1 // pred_check
      _
    $region35: #{tpu_custom_call.1} parent=1 // pred_check_branch
      %269 = sbr.rel (0) target = $region37
    $region36: #{tpu_custom_call.1} parent=1 // pred_region
      %s271 = ssub.s32 128, 128
      %272 = vsyncadd [#allocation4], %s271
      %s274 = sshll.u32 [#allocation8], 4
      %s275 = int_to_ptr.vmem [resolvable:$true] %s274
      %277 = dma.vmem_to_hbm [thread:$0]  %s275, 128, %s5, [#allocation4]
    $region37: #{tpu_custom_call.1} parent=1 // pred_fallthru
      _
    // Predicated region
    $region38: #{tpu_custom_call.1} parent=1 // pred_check
      _
    $region39: #{tpu_custom_call.1} parent=1 // pred_check_branch
      %279 = sbr.rel (0) target = $region41
    $region40: #{tpu_custom_call.1} parent=1 // pred_region
      %280 = dma.done [#allocation4], 128
    $region41: #{tpu_custom_call.1} parent=1 // pred_fallthru
      _
    %281 = vsyncpa [#allocation3], 1
    %282 = vsyncpa [#allocation6], 1
    %283 = vsyncpa [#allocation4], 1

</llo_original>
